<compile_context>
chip_gen: v7x
topology: tpu7x:2x2x1
jax: 0.10.0
libtpu: 0.0.40
codegen_flags: <defaults>
</compile_context>

<pallas_src>
import functools

import jax
import jax.numpy as jnp
from jax.experimental import pallas as pl
from jax.experimental.pallas import tpu as pltpu


def _train_kernel(scale_ref, x_ref, run_ref, out_ref, new_run_ref, *,
                  momentum, moving_coeff):
    x = x_ref[...]                                     # (B, TF) f32
    scale = scale_ref[0]                               # 0.5 * B / ang_inc_eff
    s = jnp.sum(x, axis=0, keepdims=True)              # (1, TF) sublane reduce
    y = scale / (s + x)                                # == 0.5 / x_mean / ang_eff
    out_ref[...] = y * x
    # new_run = m * run + (1-m) * mean_b(y)  ;  moving_coeff = (1-m)/B
    new_run_ref[...] = (momentum * run_ref[...]
                        + moving_coeff * jnp.sum(y, axis=0, keepdims=True))


def _eval_kernel(x_ref, run_ref, out_ref):
    out_ref[...] = run_ref[...] * x_ref[...]           # (1,TF) * (B,TF) broadcast


def _pick_tf(batch, feat, itemsize, vmem_budget_bytes=8 * 1024 * 1024):
    """Largest multiple-of-128 feature tile dividing F that fits the VMEM budget."""
    if feat % 128 != 0:
        return feat  # odd / tiny F: single full-extent block (always legal)
    # Per lane column, double-buffered: x tile + out tile (B rows each) plus
    # run + new_run rows (1 row each).
    per_lane_bytes = 2 * itemsize * (2 * batch + 2)
    best = 128
    tf = 128
    while tf <= feat:
        if feat % tf == 0 and per_lane_bytes * tf <= vmem_budget_bytes:
            best = tf
        tf += 128
    return best


def qc_norm_try3(x, x_running_rot, ang_inc, *, training=True, momentum=0.1):
    """Functional equivalent of QC_Norm_try3.forward.

    Args:
      x:             (B, F) float32.
      x_running_rot: (F,)   float32 running-rotation buffer.
      ang_inc:       scalar float32 learnable parameter.
    Returns:
      (out, new_running_rot): out is (B, F); new_running_rot is updated in
      training mode and returned unchanged in eval mode.
    """
    B, F = x.shape
    dtype = x.dtype
    run2d = x_running_rot.reshape(1, F).astype(dtype)
    TF = _pick_tf(B, F, jnp.dtype(dtype).itemsize)
    grid = (F // TF,)

    x_spec = pl.BlockSpec((B, TF), lambda j: (0, j))     # F on lanes, lane-dense
    run_spec = pl.BlockSpec((1, TF), lambda j: (0, j))
    cparams = pltpu.CompilerParams(dimension_semantics=("parallel",))

    if not training:
        out = pl.pallas_call(
            _eval_kernel,
            out_shape=jax.ShapeDtypeStruct((B, F), dtype),
            grid=grid,
            in_specs=[x_spec, run_spec],
            out_specs=x_spec,
            compiler_params=cparams,
        )(x, run2d)
        return out, x_running_rot

    # Fold the scalar parameter into a single scale: y = scale / (s + x).
    ang_inc = jnp.asarray(ang_inc, dtype=dtype)
    ang_inc_eff = (ang_inc > 0).astype(dtype) * ang_inc + 1.0
    scale_arr = jnp.reshape((0.5 * B) / ang_inc_eff, (1,)).astype(jnp.float32)
    scale_spec = pl.BlockSpec(memory_space=pltpu.MemorySpace.SMEM)

    out, new_run = pl.pallas_call(
        functools.partial(_train_kernel, momentum=momentum,
                          moving_coeff=(1.0 - momentum) / B),
        out_shape=(
            jax.ShapeDtypeStruct((B, F), dtype),
            jax.ShapeDtypeStruct((1, F), dtype),
        ),
        grid=grid,
        in_specs=[scale_spec, x_spec, run_spec],
        out_specs=(x_spec, run_spec),
        compiler_params=cparams,
    )(scale_arr, x, run2d)
    return out, new_run.reshape(F)


def _reference(x, running_rot, ang_inc, training=True, momentum=0.1):
    """Pure-JAX mirror of the PyTorch forward (transpose + reduce(-1))."""
    if not training:
        return running_rot * x, running_rot
    xt = x.T                                           # (F, B)
    Bsz = xt.shape[-1]
    x_sum = xt.sum(-1, keepdims=True)                  # (F, 1)
    x_lack_sum = x_sum + xt
    x_mean = x_lack_sum / Bsz
    ang_inc_eff = (ang_inc > 0).astype(x.dtype) * ang_inc + 1.0
    y = 0.5 / x_mean
    y = y / ang_inc_eff
    x_moving_rot = y.sum(-1) / Bsz                     # (F,)
    new_run = momentum * running_rot + (1.0 - momentum) * x_moving_rot
    out = (y * xt).T
    return out, new_run


if __name__ == "__main__":
    key = jax.random.PRNGKey(0)
    B, F = 8, 256  # batch=8, num_features=256 (lane-dense feature tiles)
    x = jax.random.uniform(key, (B, F), dtype=jnp.float32, minval=0.1, maxval=1.0)
    running_rot = jnp.zeros((F,), dtype=jnp.float32)
    ang_inc = jnp.asarray(1.0, dtype=jnp.float32)      # init_ang_inc=1

    # Training-mode forward (module default).
    out_tr, new_run = qc_norm_try3(x, running_rot, ang_inc, training=True)
    jax.block_until_ready((out_tr, new_run))

    # Eval-mode forward using the updated running buffer.
    out_ev, _ = qc_norm_try3(x, new_run, ang_inc, training=False)
    jax.block_until_ready(out_ev)

    # Correctness check against a pure-JAX reference of the PyTorch semantics.
    ref_tr, ref_run = _reference(x, running_rot, ang_inc, training=True)
    ref_ev, _ = _reference(x, ref_run, ang_inc, training=False)
    assert jnp.allclose(out_tr, ref_tr, atol=1e-4, rtol=1e-4), "train out mismatch"
    assert jnp.allclose(new_run, ref_run, atol=1e-4, rtol=1e-4), "running_rot mismatch"
    assert jnp.allclose(out_ev, ref_ev, atol=1e-4, rtol=1e-4), "eval out mismatch"

    print("KERNEL_OK")
</pallas_src>

<mosaic_0001>
module attributes {stable_mosaic.version = 11 : i64} {
  func.func @_train_kernel(%arg0: i32, %arg1: memref<1xf32, #tpu.memory_space<smem>>, %arg2: memref<8x256xf32, #tpu.memory_space<vmem>>, %arg3: memref<1x256xf32, #tpu.memory_space<vmem>>, %arg4: memref<8x256xf32, #tpu.memory_space<vmem>>, %arg5: memref<1x256xf32, #tpu.memory_space<vmem>>) attributes {dimension_semantics = [#tpu.dimension_semantics<parallel>], iteration_bounds = array<i64: 1>, scalar_prefetch = 0 : i64, scratch_operands = 0 : i64, tpu.core_type = #tpu.core_type<tc>, window_params = [{transform_indices = @transform_0, window_bounds = array<i64: 1>}, {transform_indices = @transform_1, window_bounds = array<i64: 8, 256>}, {transform_indices = @transform_2, window_bounds = array<i64: 1, 256>}, {transform_indices = @transform_3, window_bounds = array<i64: 8, 256>}, {transform_indices = @transform_4, window_bounds = array<i64: 1, 256>}]} {
    %c0 = arith.constant 0 : index
    %c0_0 = arith.constant 0 : index
    %0 = vector.load %arg2[%c0, %c0_0] : memref<8x256xf32, #tpu.memory_space<vmem>>, vector<8x256xf32>
    %c0_1 = arith.constant 0 : index
    %1 = memref.load %arg1[%c0_1] : memref<1xf32, #tpu.memory_space<smem>>
    %cst = arith.constant dense<0.000000e+00> : vector<256xf32>
    %2 = vector.multi_reduction <add>, %0, %cst [0] : vector<8x256xf32> to vector<256xf32>
    %3 = vector.shape_cast %2 : vector<256xf32> to vector<1x256xf32>
    %4 = vector.broadcast %3 : vector<1x256xf32> to vector<8x256xf32>
    %5 = arith.addf %4, %0 : vector<8x256xf32>
    %6 = vector.broadcast %1 : f32 to vector<8x256xf32>
    %7 = arith.divf %6, %5 : vector<8x256xf32>
    %8 = arith.mulf %7, %0 : vector<8x256xf32>
    %c0_2 = arith.constant 0 : index
    %c0_3 = arith.constant 0 : index
    %9 = vector.load %arg4[%c0_2, %c0_3] : memref<8x256xf32, #tpu.memory_space<vmem>>, vector<8x256xf32>
    tpu.vector_store %arg4[%c0_2, %c0_3], %8 {strides = array<i32>} : memref<8x256xf32, #tpu.memory_space<vmem>>, vector<8x256xf32>,
    %c0_4 = arith.constant 0 : index
    %c0_5 = arith.constant 0 : index
    %10 = vector.load %arg3[%c0_4, %c0_5] : memref<1x256xf32, #tpu.memory_space<vmem>>, vector<1x256xf32>
    %cst_6 = arith.constant 1.000000e-01 : f32
    %11 = vector.broadcast %cst_6 : f32 to vector<1x256xf32>
    %12 = arith.mulf %11, %10 : vector<1x256xf32>
    %cst_7 = arith.constant dense<0.000000e+00> : vector<256xf32>
    %13 = vector.multi_reduction <add>, %7, %cst_7 [0] : vector<8x256xf32> to vector<256xf32>
    %14 = vector.shape_cast %13 : vector<256xf32> to vector<1x256xf32>
    %cst_8 = arith.constant 1.125000e-01 : f32
    %15 = vector.broadcast %cst_8 : f32 to vector<1x256xf32>
    %16 = arith.mulf %15, %14 : vector<1x256xf32>
    %17 = arith.addf %12, %16 : vector<1x256xf32>
    %c0_9 = arith.constant 0 : index
    %c0_10 = arith.constant 0 : index
    %18 = vector.load %arg5[%c0_9, %c0_10] : memref<1x256xf32, #tpu.memory_space<vmem>>, vector<1x256xf32>
    tpu.vector_store %arg5[%c0_9, %c0_10], %17 {strides = array<i32>} : memref<1x256xf32, #tpu.memory_space<vmem>>, vector<1x256xf32>,
    return
  }
  func.func @transform_0(%arg0: i32) -> i32 {
    %c0_i32 = arith.constant 0 : i32
    %c0_i32_0 = arith.constant 0 : i32
    return %c0_i32 : i32
  }
  func.func @transform_1(%arg0: i32) -> (i32, i32) {
    %c0_i32 = arith.constant 0 : i32
    %c0_i32_0 = arith.constant 0 : i32
    return %c0_i32, %arg0 : i32, i32
  }
  func.func @transform_2(%arg0: i32) -> (i32, i32) {
    %c0_i32 = arith.constant 0 : i32
    %c0_i32_0 = arith.constant 0 : i32
    return %c0_i32, %arg0 : i32, i32
  }
  func.func @transform_3(%arg0: i32) -> (i32, i32) {
    %c0_i32 = arith.constant 0 : i32
    %c0_i32_0 = arith.constant 0 : i32
    return %c0_i32, %arg0 : i32, i32
  }
  func.func @transform_4(%arg0: i32) -> (i32, i32) {
    %c0_i32 = arith.constant 0 : i32
    %c0_i32_0 = arith.constant 0 : i32
    return %c0_i32, %arg0 : i32, i32
  }
}

</mosaic_0001>

<llo_original>
// kernel: tpu_custom_call.1
$region0: #{tpu_custom_call.1}
  #allocation0 [shape = 'u32[]', space=smem, size = 0x4, offset = 0x4, fixed_abs, tag = 'smem constant byte address 0x4 - core index']
  #allocation1 [shape = 'u32[144,128]{1,0:T(1,128)}', space=vmem, size = 0x12000, scoped, tag = 'internal scratch']
  #allocation2 [shape = 'f32[1]{0:T(128)S(6)}', space=smem, size = 0x200, scoped, tag = 'scoped memory for tpu_custom_call.1']
  %s0 = inlined_call_operand.<no memory space> [shape: f32[1], index: 0, kind: input, shape index: {}]
  %s1 = inlined_call_operand.hbm [shape: f32[8,256], index: 1, kind: input, shape index: {}]
  %s2 = inlined_call_operand.vmem [shape: f32[1,256], index: 2, kind: input, shape index: {}]
  %s3 = inlined_call_operand.hbm [shape: f32[8,256], index: 3, kind: output, shape index: {0}]
  %s4 = inlined_call_operand.hbm [shape: f32[1,256], index: 4, kind: output, shape index: {1}]
  %5 = xla_tuple %s3, %s4
  %s6 = sld [smem:[#allocation0]]
  $region34: #{tpu_custom_call.1} parent=0
    _
  %s8 = ssub.s32 1, %s6
  %s9 = scalar_select 0, %s8, %s6
  %10 = sst [smem:[#allocation2]] %s0
  $region1: #{tpu_custom_call.1} parent=0
    #allocation3 [shape = 'u8[8192]{0}', space=vmem, size = 0x2000, scoped, tag = 'input window, operand 1, single buffered']
    #allocation4 [shape = 's32[1]{0}', space=sflag, size = 0x4, scoped, tag = 'scoped memory for tpu_custom_call.1']
    #allocation5 [shape = 's32[1]{0}', space=sflag, size = 0x4, scoped, tag = 'scoped memory for tpu_custom_call.1']
    #allocation6 [shape = 'u8[8192]{0}', space=vmem, size = 0x2000, scoped, tag = 'output window, operand 0, single buffered']
    #allocation7 [shape = 'u8[1024]{0}', space=vmem, size = 0x400, scoped, tag = 'output window, operand 1, single buffered']
    #allocation8 [shape = 's32[1]{0}', space=sflag, size = 0x4, scoped, tag = 'scoped memory for tpu_custom_call.1']
    %11 = vsyncpa [#allocation4], 0
    %12 = vsyncpa [#allocation5], 0
    %13 = vsyncpa [#allocation8], 0
    // Predicated region
    $region2: #{tpu_custom_call.1} parent=1 // pred_check
      _
    $region3: #{tpu_custom_call.1} parent=1 // pred_check_branch
      %15 = sbr.rel (0) target = $region5
    $region4: #{tpu_custom_call.1} parent=1 // pred_region
      _
    $region5: #{tpu_custom_call.1} parent=1 // pred_fallthru
      _
    // Predicated region
    $region6: #{tpu_custom_call.1} parent=1 // pred_check
      _
    $region7: #{tpu_custom_call.1} parent=1 // pred_check_branch
      %17 = sbr.rel (0) target = $region9
    $region8: #{tpu_custom_call.1} parent=1 // pred_region
      %s19 = ssub.s32 256, 256
      %20 = vsyncadd [#allocation4], %s19
      %s22 = sshll.u32 [#allocation3], 4
      %s23 = int_to_ptr.vmem [resolvable:$true] %s22
      %25 = dma.hbm_to_vmem [thread:$0]  %s1, 256, %s23, [#allocation4]
    $region9: #{tpu_custom_call.1} parent=1 // pred_fallthru
      _
    // Predicated region
    $region10: #{tpu_custom_call.1} parent=1 // pred_check
      _
    $region11: #{tpu_custom_call.1} parent=1 // pred_check_branch
      %27 = sbr.rel (0) target = $region13
    $region12: #{tpu_custom_call.1} parent=1 // pred_region
      _
    $region13: #{tpu_custom_call.1} parent=1 // pred_fallthru
      _
    // Predicated region
    $region14: #{tpu_custom_call.1} parent=1 // pred_check
      _
    $region15: #{tpu_custom_call.1} parent=1 // pred_check_branch
      %29 = sbr.rel (0) target = $region17
    $region16: #{tpu_custom_call.1} parent=1 // pred_region
      %30 = dma.done [#allocation4], 256
    $region17: #{tpu_custom_call.1} parent=1 // pred_fallthru
      _
    %v31 = vld [vmem:[#allocation3] sm:$0xff]
    %v32 = vld [vmem:[#allocation3 + $0x8] sm:$0xff]
    %s33 = sld [smem:[#allocation2]]
    %v34 = vrot.slane %v31, 4
    %v35 = vadd.f32 %v31, %v34
    %v36 = vrot.slane %v35, 2
    %v37 = vadd.f32 %v35, %v36
    %v38 = vrot.slane %v37, 1
    %v39 = vadd.f32 %v37, %v38
    %v40 = vrot.slane %v32, 4
    %v41 = vadd.f32 %v32, %v40
    %v42 = vrot.slane %v41, 2
    %v43 = vadd.f32 %v41, %v42
    %v44 = vrot.slane %v43, 1
    %v45 = vadd.f32 %v43, %v44
    %v46 = vadd.f32 %v39, %v31
    %v47 = vadd.f32 %v45, %v32
    %v48 = vstv %s33
    %v49 = vrcp.pop %v46
    %v50 = vmul.f32 %v48, %v49
    %v51 = vrcp.pop %v47
    %v52 = vmul.f32 %v48, %v51
    %v53 = vmul.f32 %v50, %v31
    %v54 = vmul.f32 %v52, %v32
    %55 = vst [vmem:[#allocation6] sm:$0xff] %v53
    %56 = vst [vmem:[#allocation6 + $0x8] sm:$0xff] %v54
    %v57 = vld [vmem:[%s2] sm:$0x3]
    %v58 = vmul.f32 %v57, 0.1
    %v59 = vrot.slane %v50, 4
    %v60 = vadd.f32 %v50, %v59
    %v61 = vrot.slane %v60, 2
    %v62 = vadd.f32 %v60, %v61
    %v63 = vrot.slane %v62, 1
    %v64 = vadd.f32 %v62, %v63
    %v65 = vrot.slane %v52, 4
    %v66 = vadd.f32 %v52, %v65
    %v67 = vrot.slane %v66, 2
    %v68 = vadd.f32 %v66, %v67
    %v69 = vrot.slane %v68, 1
    %v70 = vadd.f32 %v68, %v69
    %v71 = vmul.f32 %v64, 0.1125
    %v72 = vmul.f32 %v70, 0.1125
    %v75 = vcombine.low %v71, %v72
    %v77 = vunpack.c.l.s4 1966171168
    %v78 = vunpack.c.0.s8 %v77
    %v79 = vlaneseq
    %v80 = vshrl.u32 %v79, 7
    %v81 = vsub.s32 %v78, %v80
    %v82 = vrot.slane %v75, %v81
    %v84 = vunpack.c.l.s4 1966171168
    %v85 = vunpack.c.0.s8 %v84
    %v86 = vlaneseq
    %v87 = vshrl.u32 %v86, 7
    %v88 = vsub.s32 %v85, %v87
    %v89 = vrot.slane %v82, %v88
    %v91 = vadd.f32 %v58, %v89
    %v92 = vlaneseq
    %vm93 = vcmp.ge.s32.totalorder %v92, 0
    %vm94 = vcmp.lt.s32.totalorder %v92, 256
    %vm95 = vmand %vm93, %vm94
    %96 = vst.msk [vmem:[#allocation7] sm:$0x3] %vm95, %v91
    // Predicated region
    $region18: #{tpu_custom_call.1} parent=1 // pred_check
      _
    $region19: #{tpu_custom_call.1} parent=1 // pred_check_branch
      %98 = sbr.rel (0) target = $region21
    $region20: #{tpu_custom_call.1} parent=1 // pred_region
      %s100 = ssub.s32 256, 256
      %101 = vsyncadd [#allocation5], %s100
      %s103 = sshll.u32 [#allocation6], 4
      %s104 = int_to_ptr.vmem [resolvable:$true] %s103
      %106 = dma.vmem_to_hbm [thread:$0]  %s104, 256, %s3, [#allocation5]
    $region21: #{tpu_custom_call.1} parent=1 // pred_fallthru
      _
    // Predicated region
    $region22: #{tpu_custom_call.1} parent=1 // pred_check
      _
    $region23: #{tpu_custom_call.1} parent=1 // pred_check_branch
      %108 = sbr.rel (0) target = $region25
    $region24: #{tpu_custom_call.1} parent=1 // pred_region
      %s110 = ssub.s32 32, 32
      %111 = vsyncadd [#allocation8], %s110
      %s113 = sshll.u32 [#allocation7], 4
      %s114 = int_to_ptr.vmem [resolvable:$true] %s113
      %116 = dma.vmem_to_hbm [thread:$0]  %s114, 32, %s4, [#allocation8]
    $region25: #{tpu_custom_call.1} parent=1 // pred_fallthru
      _
    // Predicated region
    $region26: #{tpu_custom_call.1} parent=1 // pred_check
      _
    $region27: #{tpu_custom_call.1} parent=1 // pred_check_branch
      %118 = sbr.rel (0) target = $region29
    $region28: #{tpu_custom_call.1} parent=1 // pred_region
      %119 = dma.done [#allocation5], 256
    $region29: #{tpu_custom_call.1} parent=1 // pred_fallthru
      _
    // Predicated region
    $region30: #{tpu_custom_call.1} parent=1 // pred_check
      _
    $region31: #{tpu_custom_call.1} parent=1 // pred_check_branch
      %121 = sbr.rel (0) target = $region33
    $region32: #{tpu_custom_call.1} parent=1 // pred_region
      %122 = dma.done [#allocation8], 32
    $region33: #{tpu_custom_call.1} parent=1 // pred_fallthru
      _
    %123 = vsyncpa [#allocation4], 1
    %124 = vsyncpa [#allocation5], 1
    %125 = vsyncpa [#allocation8], 1

</llo_original>
